<compile_context>
chip_gen: v6e
topology: v6e:2x2x1
jax: 0.10.0
libtpu: 0.0.40
codegen_flags: <defaults>
</compile_context>

<pallas_src>
from functools import partial

import jax
import jax.numpy as jnp
from jax.experimental import pallas as pl
from jax.experimental.pallas import tpu as pltpu


# ---------------------------------------------------------------------------
# Pallas kernel: complex mode mixing, modes on the lane axis (VPU formulation)
#   ar/ai: (B, Ci, Mblk)   wr/wi: (Ci, Co, Mblk)   out_re/out_im: (B, Co, Mblk)
#   out[b,o,m] = sum_i (ar+i*ai)[b,i,m] * (wr+i*wi)[i,o,m]
# ---------------------------------------------------------------------------
def _spectral_mix_kernel(ar_ref, ai_ref, wr_ref, wi_ref, or_ref, oi_ref):
    ar = ar_ref[...]
    ai = ai_ref[...]
    wr = wr_ref[...]
    wi = wi_ref[...]
    ci = ar.shape[1]
    acc_re = jnp.zeros(or_ref.shape, jnp.float32)
    acc_im = jnp.zeros(oi_ref.shape, jnp.float32)
    # Ci-unrolled FMA reduce on the VPU; modes live on the 128-wide lane axis.
    for i in range(ci):
        a_r = ar[:, i:i + 1, :]          # (B, 1, Mblk)
        a_i = ai[:, i:i + 1, :]
        w_r = wr[i:i + 1, :, :]          # (1, Co, Mblk)
        w_i = wi[i:i + 1, :, :]
        acc_re = acc_re + a_r * w_r - a_i * w_i
        acc_im = acc_im + a_r * w_i + a_i * w_r
    or_ref[...] = acc_re
    oi_ref[...] = acc_im


def _choose_block_modes(mpad, bytes_per_mode, budget_bytes):
    """Largest multiple of 128 that divides mpad and fits the VMEM budget."""
    n = mpad // 128
    budget_modes = max(1, budget_bytes // max(1, bytes_per_mode))
    best = 128
    for d in range(1, n + 1):
        if n % d == 0 and 128 * d <= budget_modes:
            best = 128 * d
    return min(best, mpad)


def spectral_mix_pallas(ar, ai, wr, wi, *, vmem_budget_bytes=12 * 1024 * 1024):
    # ar/ai: (B, Ci, MPAD) f32;  wr/wi: (Ci, Co, MPAD) f32  (MPAD % 128 == 0)
    B, Ci, MPAD = ar.shape
    Co = wr.shape[1]

    bytes_per_mode = 4 * (2 * B * Ci + 2 * Ci * Co + 2 * B * Co)
    block_modes = _choose_block_modes(MPAD, bytes_per_mode, vmem_budget_bytes)
    grid = MPAD // block_modes

    step_bytes = block_modes * bytes_per_mode
    # Headroom for double-buffering; stays well under the 64 MiB physical VMEM on v7x.
    vmem_limit = int(min(60 * 1024 * 1024, max(16 * 1024 * 1024, 3 * step_bytes)))

    lhs_spec = pl.BlockSpec((B, Ci, block_modes), lambda g: (0, 0, g))
    w_spec = pl.BlockSpec((Ci, Co, block_modes), lambda g: (0, 0, g))
    o_spec = pl.BlockSpec((B, Co, block_modes), lambda g: (0, 0, g))

    return pl.pallas_call(
        _spectral_mix_kernel,
        out_shape=(jax.ShapeDtypeStruct((B, Co, MPAD), jnp.float32),
                   jax.ShapeDtypeStruct((B, Co, MPAD), jnp.float32)),
        grid=(grid,),
        in_specs=[lhs_spec, lhs_spec, w_spec, w_spec],
        out_specs=(o_spec, o_spec),
        compiler_params=pltpu.CompilerParams(
            dimension_semantics=("parallel",),
            vmem_limit_bytes=vmem_limit),
        cost_estimate=pl.CostEstimate(
            flops=8 * B * Ci * Co * MPAD,
            transcendentals=0,
            bytes_accessed=MPAD * bytes_per_mode),
    )(ar, ai, wr, wi)


# ---------------------------------------------------------------------------
# One-time weight packing (parameter transform, done outside the forward pass)
#   (Ci, Co, m1, m2) complex x2  ->  (wr, wi) f32, shape (Ci, Co, MPAD), modes last
# ---------------------------------------------------------------------------
def pack_spectral_weights(w1, w2):
    w = jnp.concatenate([w1, w2], axis=2)                # (Ci, Co, 2*m1, m2)
    ci, co, m1x2, m2 = w.shape
    m = m1x2 * m2
    mpad = max(128, ((m + 127) // 128) * 128)            # lane-dense, padded once
    w = w.reshape(ci, co, m)
    pad = ((0, 0), (0, 0), (0, mpad - m))
    wr = jnp.pad(jnp.real(w).astype(jnp.float32), pad)
    wi = jnp.pad(jnp.imag(w).astype(jnp.float32), pad)
    return wr, wi


# ---------------------------------------------------------------------------
# SpectralConv2d forward (matches the PyTorch module's semantics)
#   x: (B, Ci, H, W) f32 -> (B, Co, H, W) f32
# ---------------------------------------------------------------------------
def spectral_conv2d(x, wr_packed, wi_packed, *, modes1, modes2, out_channels):
    B, Ci, H, W = x.shape
    Co = out_channels
    Wh = W // 2 + 1
    M = 2 * modes1 * modes2
    MPAD = wr_packed.shape[-1]

    # TODO(synk): FFT has no Pallas primitive; XLA FFT matches torch.fft.rfftn(dim=[2,3]).
    x_ft = jnp.fft.rfftn(x, axes=(2, 3))                               # (B, Ci, H, Wh) c64

    # Gather both retained frequency slabs, flatten modes onto the last (lane) axis.
    a = jnp.concatenate([x_ft[:, :, :modes1, :modes2],
                         x_ft[:, :, H - modes1:, :modes2]], axis=2)    # (B, Ci, 2*m1, m2)
    a = a.reshape(B, Ci, M)
    pad = ((0, 0), (0, 0), (0, MPAD - M))
    ar = jnp.pad(jnp.real(a).astype(jnp.float32), pad)
    ai = jnp.pad(jnp.imag(a).astype(jnp.float32), pad)

    out_re, out_im = spectral_mix_pallas(ar, ai, wr_packed, wi_packed)  # (B, Co, MPAD) x2

    o = (out_re[:, :, :M] + 1j * out_im[:, :, :M]).astype(jnp.complex64)
    o = o.reshape(B, Co, 2 * modes1, modes2)

    if 2 * modes1 <= H:
        # Non-overlapping slabs: rebuild out_ft with concat + a single pad (no scatters).
        mid = jnp.zeros((B, Co, H - 2 * modes1, modes2), jnp.complex64)
        rows = jnp.concatenate([o[:, :, :modes1], mid, o[:, :, modes1:]], axis=2)
        out_ft = jnp.pad(rows, ((0, 0), (0, 0), (0, 0), (0, Wh - modes2)))
    else:
        # Overlapping slabs: match the PyTorch module's overwrite semantics exactly.
        out_ft = jnp.zeros((B, Co, H, Wh), jnp.complex64)
        out_ft = out_ft.at[:, :, :modes1, :modes2].set(o[:, :, :modes1])
        out_ft = out_ft.at[:, :, H - modes1:, :modes2].set(o[:, :, modes1:])

    return jnp.fft.irfftn(out_ft, s=(H, W), axes=(2, 3))


# Pure-JAX reference (mirrors the PyTorch module exactly) for validation.
def spectral_conv2d_reference(x, w1, w2, modes1, modes2):
    B, Ci, H, W = x.shape
    Co = w1.shape[1]
    Wh = W // 2 + 1
    x_ft = jnp.fft.rfftn(x, axes=(2, 3))
    o1 = jnp.einsum('bixy,ioxy->boxy', x_ft[:, :, :modes1, :modes2], w1)
    o2 = jnp.einsum('bixy,ioxy->boxy', x_ft[:, :, -modes1:, :modes2], w2)
    out_ft = jnp.zeros((B, Co, H, Wh), dtype=jnp.complex64)
    out_ft = out_ft.at[:, :, :modes1, :modes2].set(o1)
    out_ft = out_ft.at[:, :, -modes1:, :modes2].set(o2)
    return jnp.fft.irfftn(out_ft, s=(H, W), axes=(2, 3))


if __name__ == "__main__":
    B, CI, H, W = 2, 4, 16, 16
    CO, M1, M2 = 8, 6, 6            # need M1 <= H and M2 <= W//2 + 1

    key = jax.random.PRNGKey(0)
    kx, k1r, k1i, k2r, k2i = jax.random.split(key, 5)
    scale = 1.0 / (CI * CO)
    w1 = (scale * (jax.random.uniform(k1r, (CI, CO, M1, M2), jnp.float32)
                   + 1j * jax.random.uniform(k1i, (CI, CO, M1, M2), jnp.float32))
          ).astype(jnp.complex64)
    w2 = (scale * (jax.random.uniform(k2r, (CI, CO, M1, M2), jnp.float32)
                   + 1j * jax.random.uniform(k2i, (CI, CO, M1, M2), jnp.float32))
          ).astype(jnp.complex64)
    x = jax.random.normal(kx, (B, CI, H, W), jnp.float32)

    # One-time parameter transform into the lane-dense (modes-last) layout.
    wr_packed, wi_packed = pack_spectral_weights(w1, w2)

    fwd = jax.jit(partial(spectral_conv2d, modes1=M1, modes2=M2, out_channels=CO))
    out = fwd(x, wr_packed, wi_packed)
    jax.block_until_ready(out)

    ref = spectral_conv2d_reference(x, w1, w2, M1, M2)
    assert out.shape == (B, CO, H, W) and out.dtype == jnp.float32
    assert float(jnp.max(jnp.abs(out - ref))) < 1e-4
    print("KERNEL_OK")
</pallas_src>

<mosaic_0001>
module attributes {stable_mosaic.version = 11 : i64} {
  func.func @_spectral_mix_kernel(%arg0: i32, %arg1: memref<2x4x128xf32, #tpu.memory_space<vmem>>, %arg2: memref<2x4x128xf32, #tpu.memory_space<vmem>>, %arg3: memref<4x8x128xf32, #tpu.memory_space<vmem>>, %arg4: memref<4x8x128xf32, #tpu.memory_space<vmem>>, %arg5: memref<2x8x128xf32, #tpu.memory_space<vmem>>, %arg6: memref<2x8x128xf32, #tpu.memory_space<vmem>>) attributes {dimension_semantics = [#tpu.dimension_semantics<parallel>], iteration_bounds = array<i64: 1>, scalar_prefetch = 0 : i64, scratch_operands = 0 : i64, tpu.core_type = #tpu.core_type<tc>, window_params = [{transform_indices = @transform_0, window_bounds = array<i64: 2, 4, 128>}, {transform_indices = @transform_1, window_bounds = array<i64: 2, 4, 128>}, {transform_indices = @transform_2, window_bounds = array<i64: 4, 8, 128>}, {transform_indices = @transform_3, window_bounds = array<i64: 4, 8, 128>}, {transform_indices = @transform_4, window_bounds = array<i64: 2, 8, 128>}, {transform_indices = @transform_5, window_bounds = array<i64: 2, 8, 128>}]} {
    %c0 = arith.constant 0 : index
    %c0_0 = arith.constant 0 : index
    %c0_1 = arith.constant 0 : index
    %0 = vector.load %arg1[%c0, %c0_0, %c0_1] : memref<2x4x128xf32, #tpu.memory_space<vmem>>, vector<2x4x128xf32>
    %c0_2 = arith.constant 0 : index
    %c0_3 = arith.constant 0 : index
    %c0_4 = arith.constant 0 : index
    %1 = vector.load %arg2[%c0_2, %c0_3, %c0_4] : memref<2x4x128xf32, #tpu.memory_space<vmem>>, vector<2x4x128xf32>
    %c0_5 = arith.constant 0 : index
    %c0_6 = arith.constant 0 : index
    %c0_7 = arith.constant 0 : index
    %2 = vector.load %arg3[%c0_5, %c0_6, %c0_7] : memref<4x8x128xf32, #tpu.memory_space<vmem>>, vector<4x8x128xf32>
    %c0_8 = arith.constant 0 : index
    %c0_9 = arith.constant 0 : index
    %c0_10 = arith.constant 0 : index
    %3 = vector.load %arg4[%c0_8, %c0_9, %c0_10] : memref<4x8x128xf32, #tpu.memory_space<vmem>>, vector<4x8x128xf32>
    %cst = arith.constant 0.000000e+00 : f32
    %4 = vector.broadcast %cst : f32 to vector<2x8x128xf32>
    %cst_11 = arith.constant 0.000000e+00 : f32
    %5 = vector.broadcast %cst_11 : f32 to vector<2x8x128xf32>
    %6 = vector.extract_strided_slice %0 {offsets = [0, 0, 0], sizes = [2, 1, 128], strides = [1, 1, 1]} : vector<2x4x128xf32> to vector<2x1x128xf32>
    %7 = vector.extract_strided_slice %1 {offsets = [0, 0, 0], sizes = [2, 1, 128], strides = [1, 1, 1]} : vector<2x4x128xf32> to vector<2x1x128xf32>
    %8 = vector.extract_strided_slice %2 {offsets = [0, 0, 0], sizes = [1, 8, 128], strides = [1, 1, 1]} : vector<4x8x128xf32> to vector<1x8x128xf32>
    %9 = vector.extract_strided_slice %3 {offsets = [0, 0, 0], sizes = [1, 8, 128], strides = [1, 1, 1]} : vector<4x8x128xf32> to vector<1x8x128xf32>
    %10 = vector.broadcast %6 : vector<2x1x128xf32> to vector<2x8x128xf32>
    %11 = vector.broadcast %8 : vector<1x8x128xf32> to vector<2x8x128xf32>
    %12 = arith.mulf %10, %11 : vector<2x8x128xf32>
    %13 = arith.addf %4, %12 : vector<2x8x128xf32>
    %14 = vector.broadcast %7 : vector<2x1x128xf32> to vector<2x8x128xf32>
    %15 = vector.broadcast %9 : vector<1x8x128xf32> to vector<2x8x128xf32>
    %16 = arith.mulf %14, %15 : vector<2x8x128xf32>
    %17 = arith.subf %13, %16 : vector<2x8x128xf32>
    %18 = vector.broadcast %6 : vector<2x1x128xf32> to vector<2x8x128xf32>
    %19 = vector.broadcast %9 : vector<1x8x128xf32> to vector<2x8x128xf32>
    %20 = arith.mulf %18, %19 : vector<2x8x128xf32>
    %21 = arith.addf %5, %20 : vector<2x8x128xf32>
    %22 = vector.broadcast %7 : vector<2x1x128xf32> to vector<2x8x128xf32>
    %23 = vector.broadcast %8 : vector<1x8x128xf32> to vector<2x8x128xf32>
    %24 = arith.mulf %22, %23 : vector<2x8x128xf32>
    %25 = arith.addf %21, %24 : vector<2x8x128xf32>
    %26 = vector.extract_strided_slice %0 {offsets = [0, 1, 0], sizes = [2, 1, 128], strides = [1, 1, 1]} : vector<2x4x128xf32> to vector<2x1x128xf32>
    %27 = vector.extract_strided_slice %1 {offsets = [0, 1, 0], sizes = [2, 1, 128], strides = [1, 1, 1]} : vector<2x4x128xf32> to vector<2x1x128xf32>
    %28 = vector.extract_strided_slice %2 {offsets = [1, 0, 0], sizes = [1, 8, 128], strides = [1, 1, 1]} : vector<4x8x128xf32> to vector<1x8x128xf32>
    %29 = vector.extract_strided_slice %3 {offsets = [1, 0, 0], sizes = [1, 8, 128], strides = [1, 1, 1]} : vector<4x8x128xf32> to vector<1x8x128xf32>
    %30 = vector.broadcast %26 : vector<2x1x128xf32> to vector<2x8x128xf32>
    %31 = vector.broadcast %28 : vector<1x8x128xf32> to vector<2x8x128xf32>
    %32 = arith.mulf %30, %31 : vector<2x8x128xf32>
    %33 = arith.addf %17, %32 : vector<2x8x128xf32>
    %34 = vector.broadcast %27 : vector<2x1x128xf32> to vector<2x8x128xf32>
    %35 = vector.broadcast %29 : vector<1x8x128xf32> to vector<2x8x128xf32>
    %36 = arith.mulf %34, %35 : vector<2x8x128xf32>
    %37 = arith.subf %33, %36 : vector<2x8x128xf32>
    %38 = vector.broadcast %26 : vector<2x1x128xf32> to vector<2x8x128xf32>
    %39 = vector.broadcast %29 : vector<1x8x128xf32> to vector<2x8x128xf32>
    %40 = arith.mulf %38, %39 : vector<2x8x128xf32>
    %41 = arith.addf %25, %40 : vector<2x8x128xf32>
    %42 = vector.broadcast %27 : vector<2x1x128xf32> to vector<2x8x128xf32>
    %43 = vector.broadcast %28 : vector<1x8x128xf32> to vector<2x8x128xf32>
    %44 = arith.mulf %42, %43 : vector<2x8x128xf32>
    %45 = arith.addf %41, %44 : vector<2x8x128xf32>
    %46 = vector.extract_strided_slice %0 {offsets = [0, 2, 0], sizes = [2, 1, 128], strides = [1, 1, 1]} : vector<2x4x128xf32> to vector<2x1x128xf32>
    %47 = vector.extract_strided_slice %1 {offsets = [0, 2, 0], sizes = [2, 1, 128], strides = [1, 1, 1]} : vector<2x4x128xf32> to vector<2x1x128xf32>
    %48 = vector.extract_strided_slice %2 {offsets = [2, 0, 0], sizes = [1, 8, 128], strides = [1, 1, 1]} : vector<4x8x128xf32> to vector<1x8x128xf32>
    %49 = vector.extract_strided_slice %3 {offsets = [2, 0, 0], sizes = [1, 8, 128], strides = [1, 1, 1]} : vector<4x8x128xf32> to vector<1x8x128xf32>
    %50 = vector.broadcast %46 : vector<2x1x128xf32> to vector<2x8x128xf32>
    %51 = vector.broadcast %48 : vector<1x8x128xf32> to vector<2x8x128xf32>
    %52 = arith.mulf %50, %51 : vector<2x8x128xf32>
    %53 = arith.addf %37, %52 : vector<2x8x128xf32>
    %54 = vector.broadcast %47 : vector<2x1x128xf32> to vector<2x8x128xf32>
    %55 = vector.broadcast %49 : vector<1x8x128xf32> to vector<2x8x128xf32>
    %56 = arith.mulf %54, %55 : vector<2x8x128xf32>
    %57 = arith.subf %53, %56 : vector<2x8x128xf32>
    %58 = vector.broadcast %46 : vector<2x1x128xf32> to vector<2x8x128xf32>
    %59 = vector.broadcast %49 : vector<1x8x128xf32> to vector<2x8x128xf32>
    %60 = arith.mulf %58, %59 : vector<2x8x128xf32>
    %61 = arith.addf %45, %60 : vector<2x8x128xf32>
    %62 = vector.broadcast %47 : vector<2x1x128xf32> to vector<2x8x128xf32>
    %63 = vector.broadcast %48 : vector<1x8x128xf32> to vector<2x8x128xf32>
    %64 = arith.mulf %62, %63 : vector<2x8x128xf32>
    %65 = arith.addf %61, %64 : vector<2x8x128xf32>
    %66 = vector.extract_strided_slice %0 {offsets = [0, 3, 0], sizes = [2, 1, 128], strides = [1, 1, 1]} : vector<2x4x128xf32> to vector<2x1x128xf32>
    %67 = vector.extract_strided_slice %1 {offsets = [0, 3, 0], sizes = [2, 1, 128], strides = [1, 1, 1]} : vector<2x4x128xf32> to vector<2x1x128xf32>
    %68 = vector.extract_strided_slice %2 {offsets = [3, 0, 0], sizes = [1, 8, 128], strides = [1, 1, 1]} : vector<4x8x128xf32> to vector<1x8x128xf32>
    %69 = vector.extract_strided_slice %3 {offsets = [3, 0, 0], sizes = [1, 8, 128], strides = [1, 1, 1]} : vector<4x8x128xf32> to vector<1x8x128xf32>
    %70 = vector.broadcast %66 : vector<2x1x128xf32> to vector<2x8x128xf32>
    %71 = vector.broadcast %68 : vector<1x8x128xf32> to vector<2x8x128xf32>
    %72 = arith.mulf %70, %71 : vector<2x8x128xf32>
    %73 = arith.addf %57, %72 : vector<2x8x128xf32>
    %74 = vector.broadcast %67 : vector<2x1x128xf32> to vector<2x8x128xf32>
    %75 = vector.broadcast %69 : vector<1x8x128xf32> to vector<2x8x128xf32>
    %76 = arith.mulf %74, %75 : vector<2x8x128xf32>
    %77 = arith.subf %73, %76 : vector<2x8x128xf32>
    %78 = vector.broadcast %66 : vector<2x1x128xf32> to vector<2x8x128xf32>
    %79 = vector.broadcast %69 : vector<1x8x128xf32> to vector<2x8x128xf32>
    %80 = arith.mulf %78, %79 : vector<2x8x128xf32>
    %81 = arith.addf %65, %80 : vector<2x8x128xf32>
    %82 = vector.broadcast %67 : vector<2x1x128xf32> to vector<2x8x128xf32>
    %83 = vector.broadcast %68 : vector<1x8x128xf32> to vector<2x8x128xf32>
    %84 = arith.mulf %82, %83 : vector<2x8x128xf32>
    %85 = arith.addf %81, %84 : vector<2x8x128xf32>
    %c0_12 = arith.constant 0 : index
    %c0_13 = arith.constant 0 : index
    %c0_14 = arith.constant 0 : index
    %86 = vector.load %arg5[%c0_12, %c0_13, %c0_14] : memref<2x8x128xf32, #tpu.memory_space<vmem>>, vector<2x8x128xf32>
    tpu.vector_store %arg5[%c0_12, %c0_13, %c0_14], %77 {strides = array<i32>} : memref<2x8x128xf32, #tpu.memory_space<vmem>>, vector<2x8x128xf32>,
    %c0_15 = arith.constant 0 : index
    %c0_16 = arith.constant 0 : index
    %c0_17 = arith.constant 0 : index
    %87 = vector.load %arg6[%c0_15, %c0_16, %c0_17] : memref<2x8x128xf32, #tpu.memory_space<vmem>>, vector<2x8x128xf32>
    tpu.vector_store %arg6[%c0_15, %c0_16, %c0_17], %85 {strides = array<i32>} : memref<2x8x128xf32, #tpu.memory_space<vmem>>, vector<2x8x128xf32>,
    return
  }
  func.func @transform_0(%arg0: i32) -> (i32, i32, i32) {
    %c0_i32 = arith.constant 0 : i32
    %c0_i32_0 = arith.constant 0 : i32
    %c0_i32_1 = arith.constant 0 : i32
    return %c0_i32, %c0_i32_0, %arg0 : i32, i32, i32
  }
  func.func @transform_1(%arg0: i32) -> (i32, i32, i32) {
    %c0_i32 = arith.constant 0 : i32
    %c0_i32_0 = arith.constant 0 : i32
    %c0_i32_1 = arith.constant 0 : i32
    return %c0_i32, %c0_i32_0, %arg0 : i32, i32, i32
  }
  func.func @transform_2(%arg0: i32) -> (i32, i32, i32) {
    %c0_i32 = arith.constant 0 : i32
    %c0_i32_0 = arith.constant 0 : i32
    %c0_i32_1 = arith.constant 0 : i32
    return %c0_i32, %c0_i32_0, %arg0 : i32, i32, i32
  }
  func.func @transform_3(%arg0: i32) -> (i32, i32, i32) {
    %c0_i32 = arith.constant 0 : i32
    %c0_i32_0 = arith.constant 0 : i32
    %c0_i32_1 = arith.constant 0 : i32
    return %c0_i32, %c0_i32_0, %arg0 : i32, i32, i32
  }
  func.func @transform_4(%arg0: i32) -> (i32, i32, i32) {
    %c0_i32 = arith.constant 0 : i32
    %c0_i32_0 = arith.constant 0 : i32
    %c0_i32_1 = arith.constant 0 : i32
    return %c0_i32, %c0_i32_0, %arg0 : i32, i32, i32
  }
  func.func @transform_5(%arg0: i32) -> (i32, i32, i32) {
    %c0_i32 = arith.constant 0 : i32
    %c0_i32_0 = arith.constant 0 : i32
    %c0_i32_1 = arith.constant 0 : i32
    return %c0_i32, %c0_i32_0, %arg0 : i32, i32, i32
  }
}

</mosaic_0001>

<llo_original>
// kernel: spectral_conv2d.1
$region0: #{spectral_conv2d.1}
  #allocation0 [shape = 'u32[]', space=smem, size = 0x4, offset = 0x4, fixed_abs, tag = 'smem constant byte address 0x4 - core index']
  #allocation1 [shape = 'u32[144,128]{1,0:T(1,128)}', space=vmem, size = 0x12000, scoped, tag = 'internal scratch']
  %s0 = inlined_call_operand.vmem [shape: f32[2,4,128], index: 0, kind: input, shape index: {}]
  %s1 = inlined_call_operand.vmem [shape: f32[2,4,128], index: 1, kind: input, shape index: {}]
  %s2 = inlined_call_operand.vmem [shape: f32[4,8,128], index: 2, kind: input, shape index: {}]
  %s3 = inlined_call_operand.vmem [shape: f32[4,8,128], index: 3, kind: input, shape index: {}]
  %s4 = inlined_call_operand.vmem [shape: f32[2,8,128], index: 4, kind: output, shape index: {0}]
  %s5 = inlined_call_operand.vmem [shape: f32[2,8,128], index: 5, kind: output, shape index: {1}]
  %6 = xla_tuple %s4, %s5
  %s7 = sld [smem:[#allocation0]]
  $region34: #{spectral_conv2d.1} parent=0
    _
  %s9 = ssub.s32 1, %s7
  %s10 = scalar_select 0, %s9, %s7
  // Predicated region
  $region2: #{spectral_conv2d.1} parent=0 // pred_check
    _
  $region3: #{spectral_conv2d.1} parent=0 // pred_check_branch
    %12 = sbr.rel (0) target = $region5
  $region4: #{spectral_conv2d.1} parent=0 // pred_region
    _
  $region5: #{spectral_conv2d.1} parent=0 // pred_fallthru
    _
  // Predicated region
  $region6: #{spectral_conv2d.1} parent=0 // pred_check
    _
  $region7: #{spectral_conv2d.1} parent=0 // pred_check_branch
    %14 = sbr.rel (0) target = $region9
  $region8: #{spectral_conv2d.1} parent=0 // pred_region
    _
  $region9: #{spectral_conv2d.1} parent=0 // pred_fallthru
    _
  // Predicated region
  $region10: #{spectral_conv2d.1} parent=0 // pred_check
    _
  $region11: #{spectral_conv2d.1} parent=0 // pred_check_branch
    %16 = sbr.rel (0) target = $region13
  $region12: #{spectral_conv2d.1} parent=0 // pred_region
    _
  $region13: #{spectral_conv2d.1} parent=0 // pred_fallthru
    _
  // Predicated region
  $region14: #{spectral_conv2d.1} parent=0 // pred_check
    _
  $region15: #{spectral_conv2d.1} parent=0 // pred_check_branch
    %18 = sbr.rel (0) target = $region17
  $region16: #{spectral_conv2d.1} parent=0 // pred_region
    _
  $region17: #{spectral_conv2d.1} parent=0 // pred_fallthru
    _
  %v19 = vld [vmem:[%s0] sm:$0xf]
  %v20 = vld [vmem:[%s0 + $0x4] sm:$0xf]
  %v21 = vld [vmem:[%s1] sm:$0xf]
  %v22 = vld [vmem:[%s1 + $0x4] sm:$0xf]
  %v23 = vld [vmem:[%s2] sm:$0xff]
  %v24 = vld [vmem:[%s2 + $0x8] sm:$0xff]
  %v25 = vld [vmem:[%s2 + $0x10] sm:$0xff]
  %v26 = vld [vmem:[%s2 + $0x18] sm:$0xff]
  %v27 = vld [vmem:[%s3] sm:$0xff]
  %v28 = vld [vmem:[%s3 + $0x8] sm:$0xff]
  %v29 = vld [vmem:[%s3 + $0x10] sm:$0xff]
  %v30 = vld [vmem:[%s3 + $0x18] sm:$0xff]
  %v31 = vlaneseq
  %v32 = vshrl.u32 %v31, 7
  %v33 = vsub.s32 0, %v32
  %v34 = vrot.slane %v19, %v33
  %v35 = vlaneseq
  %v36 = vshrl.u32 %v35, 7
  %v37 = vsub.s32 0, %v36
  %v38 = vrot.slane %v20, %v37
  %v39 = vmul.f32 %v34, %v23
  %v40 = vmul.f32 %v38, %v23
  %v41 = vadd.f32 %v39, 0.0
  %v42 = vadd.f32 %v40, 0.0
  %v43 = vlaneseq
  %v44 = vshrl.u32 %v43, 7
  %v45 = vsub.s32 0, %v44
  %v46 = vrot.slane %v21, %v45
  %v47 = vlaneseq
  %v48 = vshrl.u32 %v47, 7
  %v49 = vsub.s32 0, %v48
  %v50 = vrot.slane %v22, %v49
  %v51 = vmul.f32 %v46, %v27
  %v52 = vmul.f32 %v50, %v27
  %v53 = vsub.f32 %v41, %v51
  %v54 = vsub.f32 %v42, %v52
  %v55 = vmul.f32 %v34, %v27
  %v56 = vmul.f32 %v38, %v27
  %v57 = vadd.f32 %v55, 0.0
  %v58 = vadd.f32 %v56, 0.0
  %v59 = vmul.f32 %v46, %v23
  %v60 = vmul.f32 %v50, %v23
  %v61 = vadd.f32 %v57, %v59
  %v62 = vadd.f32 %v58, %v60
  %v63 = vlaneseq
  %v64 = vshrl.u32 %v63, 7
  %v65 = vsub.s32 1, %v64
  %v66 = vrot.slane %v19, %v65
  %v67 = vlaneseq
  %v68 = vshrl.u32 %v67, 7
  %v69 = vsub.s32 1, %v68
  %v70 = vrot.slane %v20, %v69
  %v71 = vmul.f32 %v66, %v24
  %v72 = vmul.f32 %v70, %v24
  %v73 = vadd.f32 %v53, %v71
  %v74 = vadd.f32 %v54, %v72
  %v75 = vlaneseq
  %v76 = vshrl.u32 %v75, 7
  %v77 = vsub.s32 1, %v76
  %v78 = vrot.slane %v21, %v77
  %v79 = vlaneseq
  %v80 = vshrl.u32 %v79, 7
  %v81 = vsub.s32 1, %v80
  %v82 = vrot.slane %v22, %v81
  %v83 = vmul.f32 %v78, %v28
  %v84 = vmul.f32 %v82, %v28
  %v85 = vsub.f32 %v73, %v83
  %v86 = vsub.f32 %v74, %v84
  %v87 = vmul.f32 %v66, %v28
  %v88 = vmul.f32 %v70, %v28
  %v89 = vadd.f32 %v61, %v87
  %v90 = vadd.f32 %v62, %v88
  %v91 = vmul.f32 %v78, %v24
  %v92 = vmul.f32 %v82, %v24
  %v93 = vadd.f32 %v89, %v91
  %v94 = vadd.f32 %v90, %v92
  %v95 = vlaneseq
  %v96 = vshrl.u32 %v95, 7
  %v97 = vsub.s32 2, %v96
  %v98 = vrot.slane %v19, %v97
  %v99 = vlaneseq
  %v100 = vshrl.u32 %v99, 7
  %v101 = vsub.s32 2, %v100
  %v102 = vrot.slane %v20, %v101
  %v103 = vmul.f32 %v98, %v25
  %v104 = vmul.f32 %v102, %v25
  %v105 = vadd.f32 %v85, %v103
  %v106 = vadd.f32 %v86, %v104
  %v107 = vlaneseq
  %v108 = vshrl.u32 %v107, 7
  %v109 = vsub.s32 2, %v108
  %v110 = vrot.slane %v21, %v109
  %v111 = vlaneseq
  %v112 = vshrl.u32 %v111, 7
  %v113 = vsub.s32 2, %v112
  %v114 = vrot.slane %v22, %v113
  %v115 = vmul.f32 %v110, %v29
  %v116 = vmul.f32 %v114, %v29
  %v117 = vsub.f32 %v105, %v115
  %v118 = vsub.f32 %v106, %v116
  %v119 = vmul.f32 %v98, %v29
  %v120 = vmul.f32 %v102, %v29
  %v121 = vadd.f32 %v93, %v119
  %v122 = vadd.f32 %v94, %v120
  %v123 = vmul.f32 %v110, %v25
  %v124 = vmul.f32 %v114, %v25
  %v125 = vadd.f32 %v121, %v123
  %v126 = vadd.f32 %v122, %v124
  %v127 = vlaneseq
  %v128 = vshrl.u32 %v127, 7
  %v129 = vsub.s32 3, %v128
  %v130 = vrot.slane %v19, %v129
  %v131 = vlaneseq
  %v132 = vshrl.u32 %v131, 7
  %v133 = vsub.s32 3, %v132
  %v134 = vrot.slane %v20, %v133
  %v135 = vmul.f32 %v130, %v26
  %v136 = vmul.f32 %v134, %v26
  %v137 = vadd.f32 %v117, %v135
  %v138 = vadd.f32 %v118, %v136
  %v139 = vlaneseq
  %v140 = vshrl.u32 %v139, 7
  %v141 = vsub.s32 3, %v140
  %v142 = vrot.slane %v21, %v141
  %v143 = vlaneseq
  %v144 = vshrl.u32 %v143, 7
  %v145 = vsub.s32 3, %v144
  %v146 = vrot.slane %v22, %v145
  %v147 = vmul.f32 %v142, %v30
  %v148 = vmul.f32 %v146, %v30
  %v149 = vsub.f32 %v137, %v147
  %v150 = vsub.f32 %v138, %v148
  %v151 = vmul.f32 %v130, %v30
  %v152 = vmul.f32 %v134, %v30
  %v153 = vadd.f32 %v125, %v151
  %v154 = vadd.f32 %v126, %v152
  %v155 = vmul.f32 %v142, %v26
  %v156 = vmul.f32 %v146, %v26
  %v157 = vadd.f32 %v153, %v155
  %v158 = vadd.f32 %v154, %v156
  %159 = vst [vmem:[%s4] sm:$0xff] %v149
  %160 = vst [vmem:[%s4 + $0x8] sm:$0xff] %v150
  %161 = vst [vmem:[%s5] sm:$0xff] %v157
  %162 = vst [vmem:[%s5 + $0x8] sm:$0xff] %v158
  // Predicated region
  $region18: #{spectral_conv2d.1} parent=0 // pred_check
    _
  $region19: #{spectral_conv2d.1} parent=0 // pred_check_branch
    %164 = sbr.rel (0) target = $region21
  $region20: #{spectral_conv2d.1} parent=0 // pred_region
    _
  $region21: #{spectral_conv2d.1} parent=0 // pred_fallthru
    _
  // Predicated region
  $region22: #{spectral_conv2d.1} parent=0 // pred_check
    _
  $region23: #{spectral_conv2d.1} parent=0 // pred_check_branch
    %166 = sbr.rel (0) target = $region25
  $region24: #{spectral_conv2d.1} parent=0 // pred_region
    _
  $region25: #{spectral_conv2d.1} parent=0 // pred_fallthru
    _
  // Predicated region
  $region26: #{spectral_conv2d.1} parent=0 // pred_check
    _
  $region27: #{spectral_conv2d.1} parent=0 // pred_check_branch
    %168 = sbr.rel (0) target = $region29
  $region28: #{spectral_conv2d.1} parent=0 // pred_region
    _
  $region29: #{spectral_conv2d.1} parent=0 // pred_fallthru
    _
  // Predicated region
  $region30: #{spectral_conv2d.1} parent=0 // pred_check
    _
  $region31: #{spectral_conv2d.1} parent=0 // pred_check_branch
    %170 = sbr.rel (0) target = $region33
  $region32: #{spectral_conv2d.1} parent=0 // pred_region
    _
  $region33: #{spectral_conv2d.1} parent=0 // pred_fallthru
    _

// kernel: reverse.1
$region0: #{reverse.1}
  %s0 = inlined_call_operand.vmem [shape: f32[2,8,16,7], index: 0, kind: input, shape index: {}]
  %s1 = inlined_call_operand.vmem [shape: f32[2,8,16,7], index: 1, kind: output, shape index: {}]
  $region1: #{reverse.1} parent=0
    #allocation0 [shape = 'u8[131072]{0}', space=vmem, size = 0x20000, scoped, tag = 'operand span for operand 0']
    #allocation1 [shape = 'u8[65536]{0}', space=vmem, size = 0x10000, scoped, tag = 'operand span for operand 1']
    %s2 = scalar_lea.vmem [#allocation0], 8
    // Predicated region
    $region2: #{reverse.1} parent=1 // pred_check
      _
    $region3: #{reverse.1} parent=1 // pred_check_branch
      %4 = sbr.rel (0) target = $region5
    $region4: #{reverse.1} parent=1 // pred_region
      // Predicated region
      $region6: #{reverse.1} parent=4 // pred_check
        _
      $region7: #{reverse.1} parent=4 // pred_check_branch
        %6 = sbr.rel (0) target = $region9
      $region8: #{reverse.1} parent=4 // pred_region
        // Predicated region
        $region21: #{reverse.1} parent=8 // pred_check
          _
        $region22: #{reverse.1} parent=8 // pred_check_branch
          %52 = sbr.rel (0) target = $region24
        $region23: #{reverse.1} parent=8 // pred_region
          loop: start=0, step=1, limit=1
          $region25: #{reverse.1} parent=23 // loop_pre_header
            _
          $region26: #{reverse.1} parent=23 // loop_header
            %s54 = sphi 0, %s58
            %p55 = scmp.ge.s32.totalorder %s54, 1
            %s59 = sphi %s0, %s0
            %s60 = sphi %s2, %s2
          $region27: #{reverse.1} parent=23 // loop_header_branch
            %57 = sbr.rel (%p55) target = $region31
          $region28: #{reverse.1} parent=23 // loop_body
            %v61 = vld [vmem:[%s59] sm:$0xff]
            %62 = vst [vmem:[%s60] sm:$0xff] %v61
            %v63 = vld [vmem:[%s59 + $0x8] sm:$0xff]
            %64 = vst [vmem:[%s60 + $0x10] sm:$0xff] %v63
            %v65 = vld [vmem:[%s59 + $0x10] sm:$0xff]
            %66 = vst [vmem:[%s60 + $0x20] sm:$0xff] %v65
            %v67 = vld [vmem:[%s59 + $0x18] sm:$0xff]
            %68 = vst [vmem:[%s60 + $0x30] sm:$0xff] %v67
            %v69 = vld [vmem:[%s59 + $0x20] sm:$0xff]
            %70 = vst [vmem:[%s60 + $0x40] sm:$0xff] %v69
            %v71 = vld [vmem:[%s59 + $0x28] sm:$0xff]
            %72 = vst [vmem:[%s60 + $0x50] sm:$0xff] %v71
            %v73 = vld [vmem:[%s59 + $0x30] sm:$0xff]
            %74 = vst [vmem:[%s60 + $0x60] sm:$0xff] %v73
            %v75 = vld [vmem:[%s59 + $0x38] sm:$0xff]
            %76 = vst [vmem:[%s60 + $0x70] sm:$0xff] %v75
            %v77 = vld [vmem:[%s59 + $0x40] sm:$0xff]
            %78 = vst [vmem:[%s60 + $0x80] sm:$0xff] %v77
            %v79 = vld [vmem:[%s59 + $0x48] sm:$0xff]
            %80 = vst [vmem:[%s60 + $0x90] sm:$0xff] %v79
            %v81 = vld [vmem:[%s59 + $0x50] sm:$0xff]
            %82 = vst [vmem:[%s60 + $0xa0] sm:$0xff] %v81
            %v83 = vld [vmem:[%s59 + $0x58] sm:$0xff]
            %84 = vst [vmem:[%s60 + $0xb0] sm:$0xff] %v83
            %v85 = vld [vmem:[%s59 + $0x60] sm:$0xff]
            %86 = vst [vmem:[%s60 + $0xc0] sm:$0xff] %v85
            %v87 = vld [vmem:[%s59 + $0x68] sm:$0xff]
            %88 = vst [vmem:[%s60 + $0xd0] sm:$0xff] %v87
            %v89 = vld [vmem:[%s59 + $0x70] sm:$0xff]
            %90 = vst [vmem:[%s60 + $0xe0] sm:$0xff] %v89
            %v91 = vld [vmem:[%s59 + $0x78] sm:$0xff]
            %92 = vst [vmem:[%s60 + $0xf0] sm:$0xff] %v91
          $region29: #{reverse.1} parent=23 // loop_footer
            %s58 = sadd.s32 1, %s54
          $region30: #{reverse.1} parent=23 // loop_footer_branch
            %53 = sbr.rel target = $region26
          $region31: #{reverse.1} parent=23 // loop_exit
            _
        $region24: #{reverse.1} parent=8 // pred_fallthru
          _
        // Predicated region
        $region32: #{reverse.1} parent=8 // pred_check
          _
        $region33: #{reverse.1} parent=8 // pred_check_branch
          %94 = sbr.rel target = $region35
        $region34: #{reverse.1} parent=8 // pred_region
          _
        $region35: #{reverse.1} parent=8 // pred_fallthru
          _
      $region9: #{reverse.1} parent=4 // pred_fallthru
        _
      // Predicated region
      $region10: #{reverse.1} parent=4 // pred_check
        _
      $region11: #{reverse.1} parent=4 // pred_check_branch
        %8 = sbr.rel target = $region13
      $region12: #{reverse.1} parent=4 // pred_region
        %s10 = ssub.s32 256, 1
        loop: start=0, step=1, limit=1
        $region14: #{reverse.1} parent=12 // loop_pre_header
          _
        $region15: #{reverse.1} parent=12 // loop_header
          %s12 = sphi 0, %s16
          %p13 = scmp.ge.s32.totalorder %s12, 1
          %s17 = sphi %s0, %s0
          %s18 = sphi %s2, %s2
        $region16: #{reverse.1} parent=12 // loop_header_branch
          %15 = sbr.rel (%p13) target = $region20
        $region17: #{reverse.1} parent=12 // loop_body
          %v19 = vld [vmem:[%s17] sm:%s10]
          %20 = vst [vmem:[%s18] sm:%s10] %v19
          %v21 = vld [vmem:[%s17 + $0x8] sm:%s10]
          %22 = vst [vmem:[%s18 + $0x10] sm:%s10] %v21
          %v23 = vld [vmem:[%s17 + $0x10] sm:%s10]
          %24 = vst [vmem:[%s18 + $0x20] sm:%s10] %v23
          %v25 = vld [vmem:[%s17 + $0x18] sm:%s10]
          %26 = vst [vmem:[%s18 + $0x30] sm:%s10] %v25
          %v27 = vld [vmem:[%s17 + $0x20] sm:%s10]
          %28 = vst [vmem:[%s18 + $0x40] sm:%s10] %v27
          %v29 = vld [vmem:[%s17 + $0x28] sm:%s10]
          %30 = vst [vmem:[%s18 + $0x50] sm:%s10] %v29
          %v31 = vld [vmem:[%s17 + $0x30] sm:%s10]
          %32 = vst [vmem:[%s18 + $0x60] sm:%s10] %v31
          %v33 = vld [vmem:[%s17 + $0x38] sm:%s10]
          %34 = vst [vmem:[%s18 + $0x70] sm:%s10] %v33
          %v35 = vld [vmem:[%s17 + $0x40] sm:%s10]
          %36 = vst [vmem:[%s18 + $0x80] sm:%s10] %v35
          %v37 = vld [vmem:[%s17 + $0x48] sm:%s10]
          %38 = vst [vmem:[%s18 + $0x90] sm:%s10] %v37
          %v39 = vld [vmem:[%s17 + $0x50] sm:%s10]
          %40 = vst [vmem:[%s18 + $0xa0] sm:%s10] %v39
          %v41 = vld [vmem:[%s17 + $0x58] sm:%s10]
          %42 = vst [vmem:[%s18 + $0xb0] sm:%s10] %v41
          %v43 = vld [vmem:[%s17 + $0x60] sm:%s10]
          %44 = vst [vmem:[%s18 + $0xc0] sm:%s10] %v43
          %v45 = vld [vmem:[%s17 + $0x68] sm:%s10]
          %46 = vst [vmem:[%s18 + $0xd0] sm:%s10] %v45
          %v47 = vld [vmem:[%s17 + $0x70] sm:%s10]
          %48 = vst [vmem:[%s18 + $0xe0] sm:%s10] %v47
          %v49 = vld [vmem:[%s17 + $0x78] sm:%s10]
          %50 = vst [vmem:[%s18 + $0xf0] sm:%s10] %v49
        $region18: #{reverse.1} parent=12 // loop_footer
          %s16 = sadd.s32 1, %s12
        $region19: #{reverse.1} parent=12 // loop_footer_branch
          %11 = sbr.rel target = $region15
        $region20: #{reverse.1} parent=12 // loop_exit
          _
      $region13: #{reverse.1} parent=4 // pred_fallthru
        _
    $region5: #{reverse.1} parent=1 // pred_fallthru
      _
    %95 = vnop
    %s96 = scalar_lea.vmem [#allocation0], 7
    %v97 = vld [vmem:[%s96] ss:$-1 sm:$0xff]
    %v98 = vrot.slane %v97, 1
    %99 = vst [vmem:[#allocation1] sm:$0xff] %v98
    %s100 = scalar_lea.vmem [#allocation0], 8
    %s101 = scalar_lea.vmem %s100, 7 [#allocation0]
    %v102 = vld [vmem:[%s101] ss:$-1 sm:$0xff]
    %v103 = vrot.slane %v102, 1
    %v104 = vlaneseq
    %v105 = vshrl.u32 %v104, 7
    %vm106 = vcmp.lt.s32.totalorder %v105, 7
    %107 = vst.msk [vmem:[#allocation1] sm:$0xff] %vm106, %v103
    %s108 = scalar_lea.vmem [#allocation1], 8
    %s109 = scalar_lea.vmem [#allocation0], 16
    %s110 = scalar_lea.vmem %s109, 7 [#allocation0]
    %v111 = vld [vmem:[%s110] ss:$-1 sm:$0xff]
    %v112 = vrot.slane %v111, 1
    %113 = vst [vmem:[%s108] sm:$0xff] %v112
    %s114 = scalar_lea.vmem %s109, 8 [#allocation0]
    %s115 = scalar_lea.vmem %s114, 7 [#allocation0]
    %v116 = vld [vmem:[%s115] ss:$-1 sm:$0xff]
    %v117 = vrot.slane %v116, 1
    %v118 = vlaneseq
    %v119 = vshrl.u32 %v118, 7
    %vm120 = vcmp.lt.s32.totalorder %v119, 7
    %121 = vst.msk [vmem:[%s108] sm:$0xff] %vm120, %v117
    %s122 = scalar_lea.vmem [#allocation1], 16
    %s123 = scalar_lea.vmem [#allocation0], 32
    %s124 = scalar_lea.vmem %s123, 7 [#allocation0]
    %v125 = vld [vmem:[%s124] ss:$-1 sm:$0xff]
    %v126 = vrot.slane %v125, 1
    %127 = vst [vmem:[%s122] sm:$0xff] %v126
    %s128 = scalar_lea.vmem %s123, 8 [#allocation0]
    %s129 = scalar_lea.vmem %s128, 7 [#allocation0]
    %v130 = vld [vmem:[%s129] ss:$-1 sm:$0xff]
    %v131 = vrot.slane %v130, 1
    %v132 = vlaneseq
    %v133 = vshrl.u32 %v132, 7
    %vm134 = vcmp.lt.s32.totalorder %v133, 7
    %135 = vst.msk [vmem:[%s122] sm:$0xff] %vm134, %v131
    %s136 = scalar_lea.vmem [#allocation1], 24
    %s137 = scalar_lea.vmem [#allocation0], 48
    %s138 = scalar_lea.vmem %s137, 7 [#allocation0]
    %v139 = vld [vmem:[%s138] ss:$-1 sm:$0xff]
    %v140 = vrot.slane %v139, 1
    %141 = vst [vmem:[%s136] sm:$0xff] %v140
    %s142 = scalar_lea.vmem %s137, 8 [#allocation0]
    %s143 = scalar_lea.vmem %s142, 7 [#allocation0]
    %v144 = vld [vmem:[%s143] ss:$-1 sm:$0xff]
    %v145 = vrot.slane %v144, 1
    %v146 = vlaneseq
    %v147 = vshrl.u32 %v146, 7
    %vm148 = vcmp.lt.s32.totalorder %v147, 7
    %149 = vst.msk [vmem:[%s136] sm:$0xff] %vm148, %v145
    %s150 = scalar_lea.vmem [#allocation1], 32
    %s151 = scalar_lea.vmem [#allocation0], 64
    %s152 = scalar_lea.vmem %s151, 7 [#allocation0]
    %v153 = vld [vmem:[%s152] ss:$-1 sm:$0xff]
    %v154 = vrot.slane %v153, 1
    %155 = vst [vmem:[%s150] sm:$0xff] %v154
    %s156 = scalar_lea.vmem %s151, 8 [#allocation0]
    %s157 = scalar_lea.vmem %s156, 7 [#allocation0]
    %v158 = vld [vmem:[%s157] ss:$-1 sm:$0xff]
    %v159 = vrot.slane %v158, 1
    %v160 = vlaneseq
    %v161 = vshrl.u32 %v160, 7
    %vm162 = vcmp.lt.s32.totalorder %v161, 7
    %163 = vst.msk [vmem:[%s150] sm:$0xff] %vm162, %v159
    %s164 = scalar_lea.vmem [#allocation1], 40
    %s165 = scalar_lea.vmem [#allocation0], 80
    %s166 = scalar_lea.vmem %s165, 7 [#allocation0]
    %v167 = vld [vmem:[%s166] ss:$-1 sm:$0xff]
    %v168 = vrot.slane %v167, 1
    %169 = vst [vmem:[%s164] sm:$0xff] %v168
    %s170 = scalar_lea.vmem %s165, 8 [#allocation0]
    %s171 = scalar_lea.vmem %s170, 7 [#allocation0]
    %v172 = vld [vmem:[%s171] ss:$-1 sm:$0xff]
    %v173 = vrot.slane %v172, 1
    %v174 = vlaneseq
    %v175 = vshrl.u32 %v174, 7
    %vm176 = vcmp.lt.s32.totalorder %v175, 7
    %177 = vst.msk [vmem:[%s164] sm:$0xff] %vm176, %v173
    %s178 = scalar_lea.vmem [#allocation1], 48
    %s179 = scalar_lea.vmem [#allocation0], 96
    %s180 = scalar_lea.vmem %s179, 7 [#allocation0]
    %v181 = vld [vmem:[%s180] ss:$-1 sm:$0xff]
    %v182 = vrot.slane %v181, 1
    %183 = vst [vmem:[%s178] sm:$0xff] %v182
    %s184 = scalar_lea.vmem %s179, 8 [#allocation0]
    %s185 = scalar_lea.vmem %s184, 7 [#allocation0]
    %v186 = vld [vmem:[%s185] ss:$-1 sm:$0xff]
    %v187 = vrot.slane %v186, 1
    %v188 = vlaneseq
    %v189 = vshrl.u32 %v188, 7
    %vm190 = vcmp.lt.s32.totalorder %v189, 7
    %191 = vst.msk [vmem:[%s178] sm:$0xff] %vm190, %v187
    %s192 = scalar_lea.vmem [#allocation1], 56
    %s193 = scalar_lea.vmem [#allocation0], 112
    %s194 = scalar_lea.vmem %s193, 7 [#allocation0]
    %v195 = vld [vmem:[%s194] ss:$-1 sm:$0xff]
    %v196 = vrot.slane %v195, 1
    %197 = vst [vmem:[%s192] sm:$0xff] %v196
    %s198 = scalar_lea.vmem %s193, 8 [#allocation0]
    %s199 = scalar_lea.vmem %s198, 7 [#allocation0]
    %v200 = vld [vmem:[%s199] ss:$-1 sm:$0xff]
    %v201 = vrot.slane %v200, 1
    %v202 = vlaneseq
    %v203 = vshrl.u32 %v202, 7
    %vm204 = vcmp.lt.s32.totalorder %v203, 7
    %205 = vst.msk [vmem:[%s192] sm:$0xff] %vm204, %v201
    %s206 = scalar_lea.vmem [#allocation1], 64
    %s207 = scalar_lea.vmem [#allocation0], 128
    %s208 = scalar_lea.vmem %s207, 7 [#allocation0]
    %v209 = vld [vmem:[%s208] ss:$-1 sm:$0xff]
    %v210 = vrot.slane %v209, 1
    %211 = vst [vmem:[%s206] sm:$0xff] %v210
    %s212 = scalar_lea.vmem %s207, 8 [#allocation0]
    %s213 = scalar_lea.vmem %s212, 7 [#allocation0]
    %v214 = vld [vmem:[%s213] ss:$-1 sm:$0xff]
    %v215 = vrot.slane %v214, 1
    %v216 = vlaneseq
    %v217 = vshrl.u32 %v216, 7
    %vm218 = vcmp.lt.s32.totalorder %v217, 7
    %219 = vst.msk [vmem:[%s206] sm:$0xff] %vm218, %v215
    %s220 = scalar_lea.vmem [#allocation1], 72
    %s221 = scalar_lea.vmem [#allocation0], 144
    %s222 = scalar_lea.vmem %s221, 7 [#allocation0]
    %v223 = vld [vmem:[%s222] ss:$-1 sm:$0xff]
    %v224 = vrot.slane %v223, 1
    %225 = vst [vmem:[%s220] sm:$0xff] %v224
    %s226 = scalar_lea.vmem %s221, 8 [#allocation0]
    %s227 = scalar_lea.vmem %s226, 7 [#allocation0]
    %v228 = vld [vmem:[%s227] ss:$-1 sm:$0xff]
    %v229 = vrot.slane %v228, 1
    %v230 = vlaneseq
    %v231 = vshrl.u32 %v230, 7
    %vm232 = vcmp.lt.s32.totalorder %v231, 7
    %233 = vst.msk [vmem:[%s220] sm:$0xff] %vm232, %v229
    %s234 = scalar_lea.vmem [#allocation1], 80
    %s235 = scalar_lea.vmem [#allocation0], 160
    %s236 = scalar_lea.vmem %s235, 7 [#allocation0]
    %v237 = vld [vmem:[%s236] ss:$-1 sm:$0xff]
    %v238 = vrot.slane %v237, 1
    %239 = vst [vmem:[%s234] sm:$0xff] %v238
    %s240 = scalar_lea.vmem %s235, 8 [#allocation0]
    %s241 = scalar_lea.vmem %s240, 7 [#allocation0]
    %v242 = vld [vmem:[%s241] ss:$-1 sm:$0xff]
    %v243 = vrot.slane %v242, 1
    %v244 = vlaneseq
    %v245 = vshrl.u32 %v244, 7
    %vm246 = vcmp.lt.s32.totalorder %v245, 7
    %247 = vst.msk [vmem:[%s234] sm:$0xff] %vm246, %v243
    %s248 = scalar_lea.vmem [#allocation1], 88
    %s249 = scalar_lea.vmem [#allocation0], 176
    %s250 = scalar_lea.vmem %s249, 7 [#allocation0]
    %v251 = vld [vmem:[%s250] ss:$-1 sm:$0xff]
    %v252 = vrot.slane %v251, 1
    %253 = vst [vmem:[%s248] sm:$0xff] %v252
    %s254 = scalar_lea.vmem %s249, 8 [#allocation0]
    %s255 = scalar_lea.vmem %s254, 7 [#allocation0]
    %v256 = vld [vmem:[%s255] ss:$-1 sm:$0xff]
    %v257 = vrot.slane %v256, 1
    %v258 = vlaneseq
    %v259 = vshrl.u32 %v258, 7
    %vm260 = vcmp.lt.s32.totalorder %v259, 7
    %261 = vst.msk [vmem:[%s248] sm:$0xff] %vm260, %v257
    %s262 = scalar_lea.vmem [#allocation1], 96
    %s263 = scalar_lea.vmem [#allocation0], 192
    %s264 = scalar_lea.vmem %s263, 7 [#allocation0]
    %v265 = vld [vmem:[%s264] ss:$-1 sm:$0xff]
    %v266 = vrot.slane %v265, 1
    %267 = vst [vmem:[%s262] sm:$0xff] %v266
    %s268 = scalar_lea.vmem %s263, 8 [#allocation0]
    %s269 = scalar_lea.vmem %s268, 7 [#allocation0]
    %v270 = vld [vmem:[%s269] ss:$-1 sm:$0xff]
    %v271 = vrot.slane %v270, 1
    %v272 = vlaneseq
    %v273 = vshrl.u32 %v272, 7
    %vm274 = vcmp.lt.s32.totalorder %v273, 7
    %275 = vst.msk [vmem:[%s262] sm:$0xff] %vm274, %v271
    %s276 = scalar_lea.vmem [#allocation1], 104
    %s277 = scalar_lea.vmem [#allocation0], 208
    %s278 = scalar_lea.vmem %s277, 7 [#allocation0]
    %v279 = vld [vmem:[%s278] ss:$-1 sm:$0xff]
    %v280 = vrot.slane %v279, 1
    %281 = vst [vmem:[%s276] sm:$0xff] %v280
    %s282 = scalar_lea.vmem %s277, 8 [#allocation0]
    %s283 = scalar_lea.vmem %s282, 7 [#allocation0]
    %v284 = vld [vmem:[%s283] ss:$-1 sm:$0xff]
    %v285 = vrot.slane %v284, 1
    %v286 = vlaneseq
    %v287 = vshrl.u32 %v286, 7
    %vm288 = vcmp.lt.s32.totalorder %v287, 7
    %289 = vst.msk [vmem:[%s276] sm:$0xff] %vm288, %v285
    %s290 = scalar_lea.vmem [#allocation1], 112
    %s291 = scalar_lea.vmem [#allocation0], 224
    %s292 = scalar_lea.vmem %s291, 7 [#allocation0]
    %v293 = vld [vmem:[%s292] ss:$-1 sm:$0xff]
    %v294 = vrot.slane %v293, 1
    %295 = vst [vmem:[%s290] sm:$0xff] %v294
    %s296 = scalar_lea.vmem %s291, 8 [#allocation0]
    %s297 = scalar_lea.vmem %s296, 7 [#allocation0]
    %v298 = vld [vmem:[%s297] ss:$-1 sm:$0xff]
    %v299 = vrot.slane %v298, 1
    %v300 = vlaneseq
    %v301 = vshrl.u32 %v300, 7
    %vm302 = vcmp.lt.s32.totalorder %v301, 7
    %303 = vst.msk [vmem:[%s290] sm:$0xff] %vm302, %v299
    %s304 = scalar_lea.vmem [#allocation1], 120
    %s305 = scalar_lea.vmem [#allocation0], 240
    %s306 = scalar_lea.vmem %s305, 7 [#allocation0]
    %v307 = vld [vmem:[%s306] ss:$-1 sm:$0xff]
    %v308 = vrot.slane %v307, 1
    %309 = vst [vmem:[%s304] sm:$0xff] %v308
    %s310 = scalar_lea.vmem %s305, 8 [#allocation0]
    %s311 = scalar_lea.vmem %s310, 7 [#allocation0]
    %v312 = vld [vmem:[%s311] ss:$-1 sm:$0xff]
    %v313 = vrot.slane %v312, 1
    %v314 = vlaneseq
    %v315 = vshrl.u32 %v314, 7
    %vm316 = vcmp.lt.s32.totalorder %v315, 7
    %317 = vst.msk [vmem:[%s304] sm:$0xff] %vm316, %v313
    // Predicated region
    $region36: #{reverse.1} parent=1 // pred_check
      _
    $region37: #{reverse.1} parent=1 // pred_check_branch
      %319 = sbr.rel (0) target = $region39
    $region38: #{reverse.1} parent=1 // pred_region
      // Predicated region
      $region40: #{reverse.1} parent=38 // pred_check
        _
      $region41: #{reverse.1} parent=38 // pred_check_branch
        %321 = sbr.rel (0) target = $region43
      $region42: #{reverse.1} parent=38 // pred_region
        // Predicated region
        $region55: #{reverse.1} parent=42 // pred_check
          _
        $region56: #{reverse.1} parent=42 // pred_check_branch
          %367 = sbr.rel (0) target = $region58
        $region57: #{reverse.1} parent=42 // pred_region
          loop: start=0, step=1, limit=1
          $region59: #{reverse.1} parent=57 // loop_pre_header
            _
          $region60: #{reverse.1} parent=57 // loop_header
            %s369 = sphi 0, %s373
            %p370 = scmp.ge.s32.totalorder %s369, 1
            %s374 = sphi [#allocation1], [#allocation1]
            %s375 = sphi %s1, %s1
          $region61: #{reverse.1} parent=57 // loop_header_branch
            %372 = sbr.rel (%p370) target = $region65
          $region62: #{reverse.1} parent=57 // loop_body
            %v376 = vld [vmem:[%s374] sm:$0xff]
            %377 = vst [vmem:[%s375] sm:$0xff] %v376
            %v378 = vld [vmem:[%s374 + $0x8] sm:$0xff]
            %379 = vst [vmem:[%s375 + $0x8] sm:$0xff] %v378
            %v380 = vld [vmem:[%s374 + $0x10] sm:$0xff]
            %381 = vst [vmem:[%s375 + $0x10] sm:$0xff] %v380
            %v382 = vld [vmem:[%s374 + $0x18] sm:$0xff]
            %383 = vst [vmem:[%s375 + $0x18] sm:$0xff] %v382
            %v384 = vld [vmem:[%s374 + $0x20] sm:$0xff]
            %385 = vst [vmem:[%s375 + $0x20] sm:$0xff] %v384
            %v386 = vld [vmem:[%s374 + $0x28] sm:$0xff]
            %387 = vst [vmem:[%s375 + $0x28] sm:$0xff] %v386
            %v388 = vld [vmem:[%s374 + $0x30] sm:$0xff]
            %389 = vst [vmem:[%s375 + $0x30] sm:$0xff] %v388
            %v390 = vld [vmem:[%s374 + $0x38] sm:$0xff]
            %391 = vst [vmem:[%s375 + $0x38] sm:$0xff] %v390
            %v392 = vld [vmem:[%s374 + $0x40] sm:$0xff]
            %393 = vst [vmem:[%s375 + $0x40] sm:$0xff] %v392
            %v394 = vld [vmem:[%s374 + $0x48] sm:$0xff]
            %395 = vst [vmem:[%s375 + $0x48] sm:$0xff] %v394
            %v396 = vld [vmem:[%s374 + $0x50] sm:$0xff]
            %397 = vst [vmem:[%s375 + $0x50] sm:$0xff] %v396
            %v398 = vld [vmem:[%s374 + $0x58] sm:$0xff]
            %399 = vst [vmem:[%s375 + $0x58] sm:$0xff] %v398
            %v400 = vld [vmem:[%s374 + $0x60] sm:$0xff]
            %401 = vst [vmem:[%s375 + $0x60] sm:$0xff] %v400
            %v402 = vld [vmem:[%s374 + $0x68] sm:$0xff]
            %403 = vst [vmem:[%s375 + $0x68] sm:$0xff] %v402
            %v404 = vld [vmem:[%s374 + $0x70] sm:$0xff]
            %405 = vst [vmem:[%s375 + $0x70] sm:$0xff] %v404
            %v406 = vld [vmem:[%s374 + $0x78] sm:$0xff]
            %407 = vst [vmem:[%s375 + $0x78] sm:$0xff] %v406
          $region63: #{reverse.1} parent=57 // loop_footer
            %s373 = sadd.s32 1, %s369
          $region64: #{reverse.1} parent=57 // loop_footer_branch
            %368 = sbr.rel target = $region60
          $region65: #{reverse.1} parent=57 // loop_exit
            _
        $region58: #{reverse.1} parent=42 // pred_fallthru
          _
        // Predicated region
        $region66: #{reverse.1} parent=42 // pred_check
          _
        $region67: #{reverse.1} parent=42 // pred_check_branch
          %409 = sbr.rel target = $region69
        $region68: #{reverse.1} parent=42 // pred_region
          _
        $region69: #{reverse.1} parent=42 // pred_fallthru
          _
      $region43: #{reverse.1} parent=38 // pred_fallthru
        _
      // Predicated region
      $region44: #{reverse.1} parent=38 // pred_check
        _
      $region45: #{reverse.1} parent=38 // pred_check_branch
        %323 = sbr.rel target = $region47
      $region46: #{reverse.1} parent=38 // pred_region
        %s325 = ssub.s32 256, 1
        loop: start=0, step=1, limit=1
        $region48: #{reverse.1} parent=46 // loop_pre_header
          _
        $region49: #{reverse.1} parent=46 // loop_header
          %s327 = sphi 0, %s331
          %p328 = scmp.ge.s32.totalorder %s327, 1
          %s332 = sphi [#allocation1], [#allocation1]
          %s333 = sphi %s1, %s1
        $region50: #{reverse.1} parent=46 // loop_header_branch
          %330 = sbr.rel (%p328) target = $region54
        $region51: #{reverse.1} parent=46 // loop_body
          %v334 = vld [vmem:[%s332] sm:%s325]
          %335 = vst [vmem:[%s333] sm:%s325] %v334
          %v336 = vld [vmem:[%s332 + $0x8] sm:%s325]
          %337 = vst [vmem:[%s333 + $0x8] sm:%s325] %v336
          %v338 = vld [vmem:[%s332 + $0x10] sm:%s325]
          %339 = vst [vmem:[%s333 + $0x10] sm:%s325] %v338
          %v340 = vld [vmem:[%s332 + $0x18] sm:%s325]
          %341 = vst [vmem:[%s333 + $0x18] sm:%s325] %v340
          %v342 = vld [vmem:[%s332 + $0x20] sm:%s325]
          %343 = vst [vmem:[%s333 + $0x20] sm:%s325] %v342
          %v344 = vld [vmem:[%s332 + $0x28] sm:%s325]
          %345 = vst [vmem:[%s333 + $0x28] sm:%s325] %v344
          %v346 = vld [vmem:[%s332 + $0x30] sm:%s325]
          %347 = vst [vmem:[%s333 + $0x30] sm:%s325] %v346
          %v348 = vld [vmem:[%s332 + $0x38] sm:%s325]
          %349 = vst [vmem:[%s333 + $0x38] sm:%s325] %v348
          %v350 = vld [vmem:[%s332 + $0x40] sm:%s325]
          %351 = vst [vmem:[%s333 + $0x40] sm:%s325] %v350
          %v352 = vld [vmem:[%s332 + $0x48] sm:%s325]
          %353 = vst [vmem:[%s333 + $0x48] sm:%s325] %v352
          %v354 = vld [vmem:[%s332 + $0x50] sm:%s325]
          %355 = vst [vmem:[%s333 + $0x50] sm:%s325] %v354
          %v356 = vld [vmem:[%s332 + $0x58] sm:%s325]
          %357 = vst [vmem:[%s333 + $0x58] sm:%s325] %v356
          %v358 = vld [vmem:[%s332 + $0x60] sm:%s325]
          %359 = vst [vmem:[%s333 + $0x60] sm:%s325] %v358
          %v360 = vld [vmem:[%s332 + $0x68] sm:%s325]
          %361 = vst [vmem:[%s333 + $0x68] sm:%s325] %v360
          %v362 = vld [vmem:[%s332 + $0x70] sm:%s325]
          %363 = vst [vmem:[%s333 + $0x70] sm:%s325] %v362
          %v364 = vld [vmem:[%s332 + $0x78] sm:%s325]
          %365 = vst [vmem:[%s333 + $0x78] sm:%s325] %v364
        $region52: #{reverse.1} parent=46 // loop_footer
          %s331 = sadd.s32 1, %s327
        $region53: #{reverse.1} parent=46 // loop_footer_branch
          %326 = sbr.rel target = $region49
        $region54: #{reverse.1} parent=46 // loop_exit
          _
      $region47: #{reverse.1} parent=38 // pred_fallthru
        _
    $region39: #{reverse.1} parent=1 // pred_fallthru
      _
    %410 = vnop

</llo_original>
